<compile_context>
chip_gen: v7x
topology: tpu7x:2x2x1
jax: 0.10.0
libtpu: 0.0.40
codegen_flags: <defaults>
</compile_context>

<pallas_src>
import functools

import jax
import jax.numpy as jnp
from jax.experimental import pallas as pl
from jax.experimental.pallas import tpu as pltpu


def _mlp_kernel(x_ref, w1_ref, b1_ref, w2_ref, b2_ref, w3_ref, b3_ref,
                wq_ref, bq_ref, out_ref):
    # All matmul inputs are bf16; accumulate in f32 on the MXU.
    h = jnp.dot(x_ref[...], w1_ref[...], preferred_element_type=jnp.float32)
    h = jnp.maximum(h + b1_ref[...], 0.0)                      # f32 VPU

    h = jnp.dot(h.astype(jnp.bfloat16), w2_ref[...],
                preferred_element_type=jnp.float32)
    h = jnp.maximum(h + b2_ref[...], 0.0)

    h = jnp.dot(h.astype(jnp.bfloat16), w3_ref[...],
                preferred_element_type=jnp.float32)
    h = jnp.maximum(h + b3_ref[...], 0.0)

    q = jnp.dot(h.astype(jnp.bfloat16), wq_ref[...],
                preferred_element_type=jnp.float32)
    out_ref[...] = (q + bq_ref[...]).astype(out_ref.dtype)     # lane-dense store


@functools.partial(jax.jit, static_argnames=("tile_b",))
def state_action_value_residual(x, params, tile_b=256):
    """x: [batch, num_features] float32. params: dict of f32 weights/biases."""
    w1, b1 = params["w1"], params["b1"]
    w2, b2 = params["w2"], params["b2"]
    w3, b3 = params["w3"], params["b3"]
    wq, bq = params["wq"], params["bq"]

    batch, num_features = x.shape
    hidden = w1.shape[1]
    num_actions = wq.shape[1]

    # Batch tiling: TILE_B is a multiple of 8; pad batch to a multiple of TILE_B.
    tile_b = min(tile_b, max(8, ((batch + 7) // 8) * 8))
    padded_batch = pl.cdiv(batch, tile_b) * tile_b
    if padded_batch != batch:
        x = jnp.pad(x, ((0, padded_batch - batch), (0, 0)))

    # Lane-dense output: pad the action dim up to a multiple of 128 lanes.
    out_lanes = pl.cdiv(num_actions, 128) * 128
    wq_p = jnp.pad(wq, ((0, 0), (0, out_lanes - num_actions)))
    bq_p = jnp.pad(bq, ((0, 0), (0, out_lanes - num_actions)))

    # bf16 MXU inputs (biases stay f32; accumulation is f32 inside the kernel).
    x_bf = x.astype(jnp.bfloat16)
    w1_bf = w1.astype(jnp.bfloat16)
    w2_bf = w2.astype(jnp.bfloat16)
    w3_bf = w3.astype(jnp.bfloat16)
    wq_bf = wq_p.astype(jnp.bfloat16)

    grid = (padded_batch // tile_b,)

    out_padded = pl.pallas_call(
        _mlp_kernel,
        out_shape=jax.ShapeDtypeStruct((padded_batch, out_lanes), jnp.float32),
        grid=grid,
        in_specs=[
            # Activations: tiled over batch, new tile per grid step.
            pl.BlockSpec((tile_b, num_features), lambda i: (i, 0)),
            # Weights / biases: constant index_map -> fetched once, VMEM-resident.
            pl.BlockSpec((num_features, hidden), lambda i: (0, 0)),
            pl.BlockSpec((1, hidden), lambda i: (0, 0)),
            pl.BlockSpec((hidden, hidden), lambda i: (0, 0)),
            pl.BlockSpec((1, hidden), lambda i: (0, 0)),
            pl.BlockSpec((hidden, hidden), lambda i: (0, 0)),
            pl.BlockSpec((1, hidden), lambda i: (0, 0)),
            pl.BlockSpec((hidden, out_lanes), lambda i: (0, 0)),
            pl.BlockSpec((1, out_lanes), lambda i: (0, 0)),
        ],
        out_specs=pl.BlockSpec((tile_b, out_lanes), lambda i: (i, 0)),
        compiler_params=pltpu.CompilerParams(
            dimension_semantics=("parallel",)),
    )(x_bf, w1_bf, b1, w2_bf, b2, w3_bf, b3, wq_bf, bq_p)

    return out_padded[:batch, :num_actions]


def init_params(key, num_features, num_actions, hidden=64, zero_head=True):
    """Deterministic synthetic init (PyTorch-Linear-like uniform bounds)."""
    ks = jax.random.split(key, 8)

    def linear_init(kw, kb, fan_in, fan_out):
        bound = 1.0 / jnp.sqrt(jnp.float32(fan_in))
        w = jax.random.uniform(kw, (fan_in, fan_out), jnp.float32, -bound, bound)
        b = jax.random.uniform(kb, (1, fan_out), jnp.float32, -bound, bound)
        return w, b

    w1, b1 = linear_init(ks[0], ks[1], num_features, hidden)
    w2, b2 = linear_init(ks[2], ks[3], hidden, hidden)
    w3, b3 = linear_init(ks[4], ks[5], hidden, hidden)
    if zero_head:
        # q_out initialized to zeros, exactly as in the PyTorch module.
        wq = jnp.zeros((hidden, num_actions), jnp.float32)
        bq = jnp.zeros((1, num_actions), jnp.float32)
    else:
        wq, bq = linear_init(ks[6], ks[7], hidden, num_actions)
    return {"w1": w1, "b1": b1, "w2": w2, "b2": b2,
            "w3": w3, "b3": b3, "wq": wq, "bq": bq}


def reference_forward(x, p):
    h = jax.nn.relu(x @ p["w1"] + p["b1"])
    h = jax.nn.relu(h @ p["w2"] + p["b2"])
    h = jax.nn.relu(h @ p["w3"] + p["b3"])
    return h @ p["wq"] + p["bq"]


if __name__ == "__main__":
    key = jax.random.PRNGKey(0)
    k_x, k_p, k_p2 = jax.random.split(key, 3)

    batch = 8
    num_features = 16   # env_params['num_features']
    num_actions = 4     # env_params['num_actions']

    x = jax.random.normal(k_x, (batch, num_features), jnp.float32)

    # 1) Exact module init: zero q_out head -> output must be exactly zero.
    params = init_params(k_p, num_features, num_actions, hidden=64, zero_head=True)
    q = state_action_value_residual(x, params)
    jax.block_until_ready(q)
    assert q.shape == (batch, num_actions)
    assert jnp.allclose(q, jnp.zeros_like(q)), "zero-initialized head must give zeros"

    # 2) Non-zero head to actually exercise numerics (bf16 MXU inputs, f32 accum).
    params2 = init_params(k_p2, num_features, num_actions, hidden=64, zero_head=False)
    q2 = state_action_value_residual(x, params2)
    jax.block_until_ready(q2)
    q2_ref = reference_forward(x, params2)
    assert jnp.allclose(q2, q2_ref, atol=5e-2, rtol=5e-2), (
        f"max abs err {jnp.max(jnp.abs(q2 - q2_ref))}")

    print("KERNEL_OK")
</pallas_src>

<mosaic_0001>
module attributes {stable_mosaic.version = 11 : i64} {
  func.func @_mlp_kernel(%arg0: i32, %arg1: memref<8x16xbf16, #tpu.memory_space<vmem>>, %arg2: memref<16x64xbf16, #tpu.memory_space<vmem>>, %arg3: memref<1x64xf32, #tpu.memory_space<vmem>>, %arg4: memref<64x64xbf16, #tpu.memory_space<vmem>>, %arg5: memref<1x64xf32, #tpu.memory_space<vmem>>, %arg6: memref<64x64xbf16, #tpu.memory_space<vmem>>, %arg7: memref<1x64xf32, #tpu.memory_space<vmem>>, %arg8: memref<64x128xbf16, #tpu.memory_space<vmem>>, %arg9: memref<1x128xf32, #tpu.memory_space<vmem>>, %arg10: memref<8x128xf32, #tpu.memory_space<vmem>>) attributes {dimension_semantics = [#tpu.dimension_semantics<parallel>], iteration_bounds = array<i64: 1>, scalar_prefetch = 0 : i64, scratch_operands = 0 : i64, tpu.core_type = #tpu.core_type<tc>, window_params = [{transform_indices = @transform_0, window_bounds = array<i64: 8, 16>}, {pipeline_mode = #tpu.pipeline_mode<synchronous>, transform_indices = @transform_1, window_bounds = array<i64: 16, 64>}, {pipeline_mode = #tpu.pipeline_mode<synchronous>, transform_indices = @transform_2, window_bounds = array<i64: 1, 64>}, {pipeline_mode = #tpu.pipeline_mode<synchronous>, transform_indices = @transform_3, window_bounds = array<i64: 64, 64>}, {pipeline_mode = #tpu.pipeline_mode<synchronous>, transform_indices = @transform_4, window_bounds = array<i64: 1, 64>}, {pipeline_mode = #tpu.pipeline_mode<synchronous>, transform_indices = @transform_5, window_bounds = array<i64: 64, 64>}, {pipeline_mode = #tpu.pipeline_mode<synchronous>, transform_indices = @transform_6, window_bounds = array<i64: 1, 64>}, {pipeline_mode = #tpu.pipeline_mode<synchronous>, transform_indices = @transform_7, window_bounds = array<i64: 64, 128>}, {pipeline_mode = #tpu.pipeline_mode<synchronous>, transform_indices = @transform_8, window_bounds = array<i64: 1, 128>}, {transform_indices = @transform_9, window_bounds = array<i64: 8, 128>}]} {
    %c0 = arith.constant 0 : index
    %c0_0 = arith.constant 0 : index
    %0 = vector.load %arg1[%c0, %c0_0] : memref<8x16xbf16, #tpu.memory_space<vmem>>, vector<8x16xbf16>
    %c0_1 = arith.constant 0 : index
    %c0_2 = arith.constant 0 : index
    %1 = vector.load %arg2[%c0_1, %c0_2] : memref<16x64xbf16, #tpu.memory_space<vmem>>, vector<16x64xbf16>
    %cst = arith.constant dense<0.000000e+00> : vector<8x64xf32>
    %2 = tpu.matmul %0, %1, %cst {dimension_numbers = #tpu.dot_dimension_numbers<[1], [0], [0], [1], [0, 0, 1, 1], [], []>} : vector<8x16xbf16>, vector<16x64xbf16>, vector<8x64xf32> -> vector<8x64xf32>
    %c0_3 = arith.constant 0 : index
    %c0_4 = arith.constant 0 : index
    %3 = vector.load %arg3[%c0_3, %c0_4] : memref<1x64xf32, #tpu.memory_space<vmem>>, vector<1x64xf32>
    %4 = vector.broadcast %3 : vector<1x64xf32> to vector<8x64xf32>
    %5 = arith.addf %2, %4 : vector<8x64xf32>
    %cst_5 = arith.constant 0.000000e+00 : f32
    %6 = vector.broadcast %cst_5 : f32 to vector<8x64xf32>
    %7 = arith.maximumf %5, %6 : vector<8x64xf32>
    %8 = arith.truncf %7 : vector<8x64xf32> to vector<8x64xbf16>
    %c0_6 = arith.constant 0 : index
    %c0_7 = arith.constant 0 : index
    %9 = vector.load %arg4[%c0_6, %c0_7] : memref<64x64xbf16, #tpu.memory_space<vmem>>, vector<64x64xbf16>
    %cst_8 = arith.constant dense<0.000000e+00> : vector<8x64xf32>
    %10 = tpu.matmul %8, %9, %cst_8 {dimension_numbers = #tpu.dot_dimension_numbers<[1], [0], [0], [1], [0, 0, 1, 1], [], []>} : vector<8x64xbf16>, vector<64x64xbf16>, vector<8x64xf32> -> vector<8x64xf32>
    %c0_9 = arith.constant 0 : index
    %c0_10 = arith.constant 0 : index
    %11 = vector.load %arg5[%c0_9, %c0_10] : memref<1x64xf32, #tpu.memory_space<vmem>>, vector<1x64xf32>
    %12 = vector.broadcast %11 : vector<1x64xf32> to vector<8x64xf32>
    %13 = arith.addf %10, %12 : vector<8x64xf32>
    %cst_11 = arith.constant 0.000000e+00 : f32
    %14 = vector.broadcast %cst_11 : f32 to vector<8x64xf32>
    %15 = arith.maximumf %13, %14 : vector<8x64xf32>
    %16 = arith.truncf %15 : vector<8x64xf32> to vector<8x64xbf16>
    %c0_12 = arith.constant 0 : index
    %c0_13 = arith.constant 0 : index
    %17 = vector.load %arg6[%c0_12, %c0_13] : memref<64x64xbf16, #tpu.memory_space<vmem>>, vector<64x64xbf16>
    %cst_14 = arith.constant dense<0.000000e+00> : vector<8x64xf32>
    %18 = tpu.matmul %16, %17, %cst_14 {dimension_numbers = #tpu.dot_dimension_numbers<[1], [0], [0], [1], [0, 0, 1, 1], [], []>} : vector<8x64xbf16>, vector<64x64xbf16>, vector<8x64xf32> -> vector<8x64xf32>
    %c0_15 = arith.constant 0 : index
    %c0_16 = arith.constant 0 : index
    %19 = vector.load %arg7[%c0_15, %c0_16] : memref<1x64xf32, #tpu.memory_space<vmem>>, vector<1x64xf32>
    %20 = vector.broadcast %19 : vector<1x64xf32> to vector<8x64xf32>
    %21 = arith.addf %18, %20 : vector<8x64xf32>
    %cst_17 = arith.constant 0.000000e+00 : f32
    %22 = vector.broadcast %cst_17 : f32 to vector<8x64xf32>
    %23 = arith.maximumf %21, %22 : vector<8x64xf32>
    %24 = arith.truncf %23 : vector<8x64xf32> to vector<8x64xbf16>
    %c0_18 = arith.constant 0 : index
    %c0_19 = arith.constant 0 : index
    %25 = vector.load %arg8[%c0_18, %c0_19] : memref<64x128xbf16, #tpu.memory_space<vmem>>, vector<64x128xbf16>
    %cst_20 = arith.constant dense<0.000000e+00> : vector<8x128xf32>
    %26 = tpu.matmul %24, %25, %cst_20 {dimension_numbers = #tpu.dot_dimension_numbers<[1], [0], [0], [1], [0, 0, 1, 1], [], []>} : vector<8x64xbf16>, vector<64x128xbf16>, vector<8x128xf32> -> vector<8x128xf32>
    %c0_21 = arith.constant 0 : index
    %c0_22 = arith.constant 0 : index
    %27 = vector.load %arg9[%c0_21, %c0_22] : memref<1x128xf32, #tpu.memory_space<vmem>>, vector<1x128xf32>
    %28 = vector.broadcast %27 : vector<1x128xf32> to vector<8x128xf32>
    %29 = arith.addf %26, %28 : vector<8x128xf32>
    %c0_23 = arith.constant 0 : index
    %c0_24 = arith.constant 0 : index
    %30 = vector.load %arg10[%c0_23, %c0_24] : memref<8x128xf32, #tpu.memory_space<vmem>>, vector<8x128xf32>
    tpu.vector_store %arg10[%c0_23, %c0_24], %29 {strides = array<i32>} : memref<8x128xf32, #tpu.memory_space<vmem>>, vector<8x128xf32>,
    return
  }
  func.func @transform_0(%arg0: i32) -> (i32, i32) {
    %c0_i32 = arith.constant 0 : i32
    %c0_i32_0 = arith.constant 0 : i32
    return %arg0, %c0_i32 : i32, i32
  }
  func.func @transform_1(%arg0: i32) -> (i32, i32) {
    %c0_i32 = arith.constant 0 : i32
    %c0_i32_0 = arith.constant 0 : i32
    %c0_i32_1 = arith.constant 0 : i32
    return %c0_i32, %c0_i32_0 : i32, i32
  }
  func.func @transform_2(%arg0: i32) -> (i32, i32) {
    %c0_i32 = arith.constant 0 : i32
    %c0_i32_0 = arith.constant 0 : i32
    %c0_i32_1 = arith.constant 0 : i32
    return %c0_i32, %c0_i32_0 : i32, i32
  }
  func.func @transform_3(%arg0: i32) -> (i32, i32) {
    %c0_i32 = arith.constant 0 : i32
    %c0_i32_0 = arith.constant 0 : i32
    %c0_i32_1 = arith.constant 0 : i32
    return %c0_i32, %c0_i32_0 : i32, i32
  }
  func.func @transform_4(%arg0: i32) -> (i32, i32) {
    %c0_i32 = arith.constant 0 : i32
    %c0_i32_0 = arith.constant 0 : i32
    %c0_i32_1 = arith.constant 0 : i32
    return %c0_i32, %c0_i32_0 : i32, i32
  }
  func.func @transform_5(%arg0: i32) -> (i32, i32) {
    %c0_i32 = arith.constant 0 : i32
    %c0_i32_0 = arith.constant 0 : i32
    %c0_i32_1 = arith.constant 0 : i32
    return %c0_i32, %c0_i32_0 : i32, i32
  }
  func.func @transform_6(%arg0: i32) -> (i32, i32) {
    %c0_i32 = arith.constant 0 : i32
    %c0_i32_0 = arith.constant 0 : i32
    %c0_i32_1 = arith.constant 0 : i32
    return %c0_i32, %c0_i32_0 : i32, i32
  }
  func.func @transform_7(%arg0: i32) -> (i32, i32) {
    %c0_i32 = arith.constant 0 : i32
    %c0_i32_0 = arith.constant 0 : i32
    %c0_i32_1 = arith.constant 0 : i32
    return %c0_i32, %c0_i32_0 : i32, i32
  }
  func.func @transform_8(%arg0: i32) -> (i32, i32) {
    %c0_i32 = arith.constant 0 : i32
    %c0_i32_0 = arith.constant 0 : i32
    %c0_i32_1 = arith.constant 0 : i32
    return %c0_i32, %c0_i32_0 : i32, i32
  }
  func.func @transform_9(%arg0: i32) -> (i32, i32) {
    %c0_i32 = arith.constant 0 : i32
    %c0_i32_0 = arith.constant 0 : i32
    return %arg0, %c0_i32 : i32, i32
  }
}

</mosaic_0001>

<llo_original>
// kernel: state_action_value_residual.1
$region0: #{state_action_value_residual.1}
  #allocation0 [shape = 'u32[]', space=smem, size = 0x4, offset = 0x4, fixed_abs, tag = 'smem constant byte address 0x4 - core index']
  #allocation1 [shape = 'u32[144,128]{1,0:T(1,128)}', space=vmem, size = 0x12000, scoped, tag = 'internal scratch']
  %s0 = inlined_call_operand.vmem [shape: bf16[8,16], index: 0, kind: input, shape index: {}]
  %s1 = inlined_call_operand.vmem [shape: bf16[16,64], index: 1, kind: input, shape index: {}]
  %s2 = inlined_call_operand.vmem [shape: f32[1,64], index: 2, kind: input, shape index: {}]
  %s3 = inlined_call_operand.vmem [shape: bf16[64,64], index: 3, kind: input, shape index: {}]
  %s4 = inlined_call_operand.vmem [shape: f32[1,64], index: 4, kind: input, shape index: {}]
  %s5 = inlined_call_operand.vmem [shape: bf16[64,64], index: 5, kind: input, shape index: {}]
  %s6 = inlined_call_operand.vmem [shape: f32[1,64], index: 6, kind: input, shape index: {}]
  %s7 = inlined_call_operand.vmem [shape: bf16[64,128], index: 7, kind: input, shape index: {}]
  %s8 = inlined_call_operand.vmem [shape: f32[1,128], index: 8, kind: input, shape index: {}]
  %s9 = inlined_call_operand.vmem [shape: f32[8,128], index: 9, kind: output, shape index: {}]
  %s10 = sld [smem:[#allocation0]]
  $region46: #{state_action_value_residual.1} parent=0
    _
  %s12 = ssub.s32 1, %s10
  %s13 = scalar_select 0, %s12, %s10
  // Predicated region
  $region2: #{state_action_value_residual.1} parent=0 // pred_check
    _
  $region3: #{state_action_value_residual.1} parent=0 // pred_check_branch
    %15 = sbr.rel (0) target = $region5
  $region4: #{state_action_value_residual.1} parent=0 // pred_region
    _
  $region5: #{state_action_value_residual.1} parent=0 // pred_fallthru
    _
  // Predicated region
  $region6: #{state_action_value_residual.1} parent=0 // pred_check
    _
  $region7: #{state_action_value_residual.1} parent=0 // pred_check_branch
    %17 = sbr.rel (0) target = $region9
  $region8: #{state_action_value_residual.1} parent=0 // pred_region
    _
  $region9: #{state_action_value_residual.1} parent=0 // pred_fallthru
    _
  // Predicated region
  $region10: #{state_action_value_residual.1} parent=0 // pred_check
    _
  $region11: #{state_action_value_residual.1} parent=0 // pred_check_branch
    %19 = sbr.rel (0) target = $region13
  $region12: #{state_action_value_residual.1} parent=0 // pred_region
    _
  $region13: #{state_action_value_residual.1} parent=0 // pred_fallthru
    _
  // Predicated region
  $region14: #{state_action_value_residual.1} parent=0 // pred_check
    _
  $region15: #{state_action_value_residual.1} parent=0 // pred_check_branch
    %21 = sbr.rel (0) target = $region17
  $region16: #{state_action_value_residual.1} parent=0 // pred_region
    _
  $region17: #{state_action_value_residual.1} parent=0 // pred_fallthru
    _
  // Predicated region
  $region18: #{state_action_value_residual.1} parent=0 // pred_check
    _
  $region19: #{state_action_value_residual.1} parent=0 // pred_check_branch
    %23 = sbr.rel (0) target = $region21
  $region20: #{state_action_value_residual.1} parent=0 // pred_region
    _
  $region21: #{state_action_value_residual.1} parent=0 // pred_fallthru
    _
  // Predicated region
  $region22: #{state_action_value_residual.1} parent=0 // pred_check
    _
  $region23: #{state_action_value_residual.1} parent=0 // pred_check_branch
    %25 = sbr.rel (0) target = $region25
  $region24: #{state_action_value_residual.1} parent=0 // pred_region
    _
  $region25: #{state_action_value_residual.1} parent=0 // pred_fallthru
    _
  // Predicated region
  $region26: #{state_action_value_residual.1} parent=0 // pred_check
    _
  $region27: #{state_action_value_residual.1} parent=0 // pred_check_branch
    %27 = sbr.rel (0) target = $region29
  $region28: #{state_action_value_residual.1} parent=0 // pred_region
    _
  $region29: #{state_action_value_residual.1} parent=0 // pred_fallthru
    _
  // Predicated region
  $region30: #{state_action_value_residual.1} parent=0 // pred_check
    _
  $region31: #{state_action_value_residual.1} parent=0 // pred_check_branch
    %29 = sbr.rel (0) target = $region33
  $region32: #{state_action_value_residual.1} parent=0 // pred_region
    _
  $region33: #{state_action_value_residual.1} parent=0 // pred_fallthru
    _
  // Predicated region
  $region34: #{state_action_value_residual.1} parent=0 // pred_check
    _
  $region35: #{state_action_value_residual.1} parent=0 // pred_check_branch
    %31 = sbr.rel (0) target = $region37
  $region36: #{state_action_value_residual.1} parent=0 // pred_region
    _
  $region37: #{state_action_value_residual.1} parent=0 // pred_fallthru
    _
  %v33 = vld [vmem:[%s0] sm:$0xf]
  %v34 = vld [vmem:[%s1] sm:$0xf]
  %v35 = vld [vmem:[%s1 + $0x4] sm:$0xf]
  %v36 = vld [vmem:[%s2] sm:$0x1]
  %v38 = vlaneseq
  %v39 = vshrl.u32 %v38, 7
  %v40 = vsub.s32 0, %v39
  %v41 = vrot.slane %v36, %v40
  %v45 = vunpack.c.l.b16 %v34
  %v46 = vunpack.c.l.b16 %v35
  %v47 = vpack.c.b16 %v46, %v45
  %vm49 = vcmask 130048
  %v51 = vsel %vm49, %v33, 0
  %53 = vmatprep.subr.bf16.mxu0 0
  %54 = vmatpush1.bf16.msra.mxu0 %v47
  %55 = vmatprep.subr.bf16.mxu0 0
  %56 = vmatpush1.bf16.msra.mxu0 0
  %57 = vmatprep.subr.bf16.mxu0 0
  %58 = vmatpush1.bf16.msra.mxu0 0
  %59 = vmatprep.subr.bf16.mxu0 0
  %60 = vmatpush1.bf16.msra.mxu0 0
  %61 = vmatprep.subr.bf16.mxu0 0
  %62 = vmatpush1.bf16.msra.mxu0 0
  %63 = vmatprep.subr.bf16.mxu0 0
  %64 = vmatpush1.bf16.msra.mxu0 0
  %65 = vmatprep.subr.bf16.mxu0 0
  %66 = vmatpush1.bf16.msra.mxu0 0
  %67 = vmatprep.subr.bf16.mxu0 0
  %68 = vmatpush1.bf16.msra.mxu0 0
  %69 = vmatprep.subr.bf16.mxu0 0
  %70 = vmatpush1.bf16.msra.mxu0 0
  %71 = vmatprep.subr.bf16.mxu0 0
  %72 = vmatpush1.bf16.msra.mxu0 0
  %73 = vmatprep.subr.bf16.mxu0 0
  %74 = vmatpush1.bf16.msra.mxu0 0
  %75 = vmatprep.subr.bf16.mxu0 0
  %76 = vmatpush1.bf16.msra.mxu0 0
  %77 = vmatprep.subr.bf16.mxu0 0
  %78 = vmatpush1.bf16.msra.mxu0 0
  %79 = vmatprep.subr.bf16.mxu0 0
  %80 = vmatpush1.bf16.msra.mxu0 0
  %81 = vmatprep.subr.bf16.mxu0 0
  %82 = vmatpush1.bf16.msra.mxu0 0
  %83 = vmatprep.subr.bf16.mxu0 0
  %84 = vmatpush1.bf16.msra.mxu0 0
  %85 = vmatprep.mubr.bf16.mxu0 0
  %86 = vmatmul.mubr.bf16.gmra.mrb[0].mxu0 %v51
  %v87 = vpop.f32.mrb[0].mxu0
  %v88 = vadd.f32 %v41, %v87
  %v89 = vpop.f32.mrb[0].mxu0
  %v90 = vpop.f32.mrb[0].mxu0
  %v91 = vpop.f32.mrb[0].mxu0
  %92 = vdwg.mxu0
  %v93 = vmax.f32 %v88, 0.0
  %v94 = vpack.c.bf16 %v93, %v93
  %v95 = vld [vmem:[%s3] sm:$0xf]
  %v96 = vld [vmem:[%s3 + $0x4] sm:$0xf]
  %v97 = vld [vmem:[%s3 + $0x8] sm:$0xf]
  %v98 = vld [vmem:[%s3 + $0xc] sm:$0xf]
  %v99 = vld [vmem:[%s3 + $0x10] sm:$0xf]
  %v100 = vld [vmem:[%s3 + $0x14] sm:$0xf]
  %v101 = vld [vmem:[%s3 + $0x18] sm:$0xf]
  %v102 = vld [vmem:[%s3 + $0x1c] sm:$0xf]
  %v103 = vld [vmem:[%s4] sm:$0x1]
  %v105 = vlaneseq
  %v106 = vshrl.u32 %v105, 7
  %v107 = vsub.s32 0, %v106
  %v108 = vrot.slane %v103, %v107
  %v118 = vunpack.c.l.b16 %v95
  %v119 = vunpack.c.l.b16 %v96
  %v120 = vunpack.c.l.b16 %v97
  %v121 = vunpack.c.l.b16 %v98
  %v122 = vunpack.c.l.b16 %v99
  %v123 = vunpack.c.l.b16 %v100
  %v124 = vunpack.c.l.b16 %v101
  %v125 = vunpack.c.l.b16 %v102
  %v126 = vpack.c.b16 %v119, %v118
  %v127 = vpack.c.b16 %v121, %v120
  %v128 = vpack.c.b16 %v123, %v122
  %v129 = vpack.c.b16 %v125, %v124
  %vm134 = vcmask 523264
  %v136 = vsel %vm134, %v94, 0
  %138 = vmatprep.subr.bf16.mxu0 0
  %139 = vmatpush1.bf16.msra.mxu0 %v126
  %140 = vmatprep.subr.bf16.mxu0 0
  %141 = vmatpush1.bf16.msra.mxu0 %v127
  %142 = vmatprep.subr.bf16.mxu0 0
  %143 = vmatpush1.bf16.msra.mxu0 %v128
  %144 = vmatprep.subr.bf16.mxu0 0
  %145 = vmatpush1.bf16.msra.mxu0 %v129
  %146 = vmatprep.subr.bf16.mxu0 0
  %147 = vmatpush1.bf16.msra.mxu0 0
  %148 = vmatprep.subr.bf16.mxu0 0
  %149 = vmatpush1.bf16.msra.mxu0 0
  %150 = vmatprep.subr.bf16.mxu0 0
  %151 = vmatpush1.bf16.msra.mxu0 0
  %152 = vmatprep.subr.bf16.mxu0 0
  %153 = vmatpush1.bf16.msra.mxu0 0
  %154 = vmatprep.subr.bf16.mxu0 0
  %155 = vmatpush1.bf16.msra.mxu0 0
  %156 = vmatprep.subr.bf16.mxu0 0
  %157 = vmatpush1.bf16.msra.mxu0 0
  %158 = vmatprep.subr.bf16.mxu0 0
  %159 = vmatpush1.bf16.msra.mxu0 0
  %160 = vmatprep.subr.bf16.mxu0 0
  %161 = vmatpush1.bf16.msra.mxu0 0
  %162 = vmatprep.subr.bf16.mxu0 0
  %163 = vmatpush1.bf16.msra.mxu0 0
  %164 = vmatprep.subr.bf16.mxu0 0
  %165 = vmatpush1.bf16.msra.mxu0 0
  %166 = vmatprep.subr.bf16.mxu0 0
  %167 = vmatpush1.bf16.msra.mxu0 0
  %168 = vmatprep.subr.bf16.mxu0 0
  %169 = vmatpush1.bf16.msra.mxu0 0
  %170 = vmatprep.mubr.bf16.mxu0 0
  %171 = vmatmul.mubr.bf16.gmra.mrb[0].mxu0 %v136
  %v172 = vpop.f32.mrb[0].mxu0
  %v173 = vadd.f32 %v108, %v172
  %v174 = vpop.f32.mrb[0].mxu0
  %v175 = vpop.f32.mrb[0].mxu0
  %v176 = vpop.f32.mrb[0].mxu0
  %177 = vdwg.mxu0
  %v178 = vmax.f32 %v173, 0.0
  %v179 = vpack.c.bf16 %v178, %v178
  %v180 = vld [vmem:[%s5] sm:$0xf]
  %v181 = vld [vmem:[%s5 + $0x4] sm:$0xf]
  %v182 = vld [vmem:[%s5 + $0x8] sm:$0xf]
  %v183 = vld [vmem:[%s5 + $0xc] sm:$0xf]
  %v184 = vld [vmem:[%s5 + $0x10] sm:$0xf]
  %v185 = vld [vmem:[%s5 + $0x14] sm:$0xf]
  %v186 = vld [vmem:[%s5 + $0x18] sm:$0xf]
  %v187 = vld [vmem:[%s5 + $0x1c] sm:$0xf]
  %v188 = vld [vmem:[%s6] sm:$0x1]
  %v190 = vlaneseq
  %v191 = vshrl.u32 %v190, 7
  %v192 = vsub.s32 0, %v191
  %v193 = vrot.slane %v188, %v192
  %v203 = vunpack.c.l.b16 %v180
  %v204 = vunpack.c.l.b16 %v181
  %v205 = vunpack.c.l.b16 %v182
  %v206 = vunpack.c.l.b16 %v183
  %v207 = vunpack.c.l.b16 %v184
  %v208 = vunpack.c.l.b16 %v185
  %v209 = vunpack.c.l.b16 %v186
  %v210 = vunpack.c.l.b16 %v187
  %v211 = vpack.c.b16 %v204, %v203
  %v212 = vpack.c.b16 %v206, %v205
  %v213 = vpack.c.b16 %v208, %v207
  %v214 = vpack.c.b16 %v210, %v209
  %v220 = vsel %vm134, %v179, 0
  %222 = vmatprep.subr.bf16.mxu0 0
  %223 = vmatpush1.bf16.msra.mxu0 %v211
  %224 = vmatprep.subr.bf16.mxu0 0
  %225 = vmatpush1.bf16.msra.mxu0 %v212
  %226 = vmatprep.subr.bf16.mxu0 0
  %227 = vmatpush1.bf16.msra.mxu0 %v213
  %228 = vmatprep.subr.bf16.mxu0 0
  %229 = vmatpush1.bf16.msra.mxu0 %v214
  %230 = vmatprep.subr.bf16.mxu0 0
  %231 = vmatpush1.bf16.msra.mxu0 0
  %232 = vmatprep.subr.bf16.mxu0 0
  %233 = vmatpush1.bf16.msra.mxu0 0
  %234 = vmatprep.subr.bf16.mxu0 0
  %235 = vmatpush1.bf16.msra.mxu0 0
  %236 = vmatprep.subr.bf16.mxu0 0
  %237 = vmatpush1.bf16.msra.mxu0 0
  %238 = vmatprep.subr.bf16.mxu0 0
  %239 = vmatpush1.bf16.msra.mxu0 0
  %240 = vmatprep.subr.bf16.mxu0 0
  %241 = vmatpush1.bf16.msra.mxu0 0
  %242 = vmatprep.subr.bf16.mxu0 0
  %243 = vmatpush1.bf16.msra.mxu0 0
  %244 = vmatprep.subr.bf16.mxu0 0
  %245 = vmatpush1.bf16.msra.mxu0 0
  %246 = vmatprep.subr.bf16.mxu0 0
  %247 = vmatpush1.bf16.msra.mxu0 0
  %248 = vmatprep.subr.bf16.mxu0 0
  %249 = vmatpush1.bf16.msra.mxu0 0
  %250 = vmatprep.subr.bf16.mxu0 0
  %251 = vmatpush1.bf16.msra.mxu0 0
  %252 = vmatprep.subr.bf16.mxu0 0
  %253 = vmatpush1.bf16.msra.mxu0 0
  %254 = vmatprep.mubr.bf16.mxu0 0
  %255 = vmatmul.mubr.bf16.gmra.mrb[0].mxu0 %v220
  %v256 = vpop.f32.mrb[0].mxu0
  %v257 = vadd.f32 %v193, %v256
  %v258 = vpop.f32.mrb[0].mxu0
  %v259 = vpop.f32.mrb[0].mxu0
  %v260 = vpop.f32.mrb[0].mxu0
  %261 = vdwg.mxu0
  %v262 = vmax.f32 %v257, 0.0
  %v263 = vpack.c.bf16 %v262, %v262
  %v264 = vld [vmem:[%s7] sm:$0xf]
  %v265 = vld [vmem:[%s7 + $0x4] sm:$0xf]
  %v266 = vld [vmem:[%s7 + $0x8] sm:$0xf]
  %v267 = vld [vmem:[%s7 + $0xc] sm:$0xf]
  %v268 = vld [vmem:[%s7 + $0x10] sm:$0xf]
  %v269 = vld [vmem:[%s7 + $0x14] sm:$0xf]
  %v270 = vld [vmem:[%s7 + $0x18] sm:$0xf]
  %v271 = vld [vmem:[%s7 + $0x1c] sm:$0xf]
  %v272 = vld [vmem:[%s8] sm:$0x1]
  %v274 = vlaneseq
  %v275 = vshrl.u32 %v274, 7
  %v276 = vsub.s32 0, %v275
  %v277 = vrot.slane %v272, %v276
  %v287 = vunpack.c.l.b16 %v264
  %v288 = vunpack.c.l.b16 %v265
  %v289 = vunpack.c.l.b16 %v266
  %v290 = vunpack.c.l.b16 %v267
  %v291 = vunpack.c.l.b16 %v268
  %v292 = vunpack.c.l.b16 %v269
  %v293 = vunpack.c.l.b16 %v270
  %v294 = vunpack.c.l.b16 %v271
  %v295 = vpack.c.b16 %v288, %v287
  %v296 = vpack.c.b16 %v290, %v289
  %v297 = vpack.c.b16 %v292, %v291
  %v298 = vpack.c.b16 %v294, %v293
  %v304 = vsel %vm134, %v263, 0
  %306 = vmatprep.subr.bf16.mxu0 0
  %307 = vmatpush1.bf16.msra.mxu0 %v295
  %308 = vmatprep.subr.bf16.mxu0 0
  %309 = vmatpush1.bf16.msra.mxu0 %v296
  %310 = vmatprep.subr.bf16.mxu0 0
  %311 = vmatpush1.bf16.msra.mxu0 %v297
  %312 = vmatprep.subr.bf16.mxu0 0
  %313 = vmatpush1.bf16.msra.mxu0 %v298
  %314 = vmatprep.subr.bf16.mxu0 0
  %315 = vmatpush1.bf16.msra.mxu0 0
  %316 = vmatprep.subr.bf16.mxu0 0
  %317 = vmatpush1.bf16.msra.mxu0 0
  %318 = vmatprep.subr.bf16.mxu0 0
  %319 = vmatpush1.bf16.msra.mxu0 0
  %320 = vmatprep.subr.bf16.mxu0 0
  %321 = vmatpush1.bf16.msra.mxu0 0
  %322 = vmatprep.subr.bf16.mxu0 0
  %323 = vmatpush1.bf16.msra.mxu0 0
  %324 = vmatprep.subr.bf16.mxu0 0
  %325 = vmatpush1.bf16.msra.mxu0 0
  %326 = vmatprep.subr.bf16.mxu0 0
  %327 = vmatpush1.bf16.msra.mxu0 0
  %328 = vmatprep.subr.bf16.mxu0 0
  %329 = vmatpush1.bf16.msra.mxu0 0
  %330 = vmatprep.subr.bf16.mxu0 0
  %331 = vmatpush1.bf16.msra.mxu0 0
  %332 = vmatprep.subr.bf16.mxu0 0
  %333 = vmatpush1.bf16.msra.mxu0 0
  %334 = vmatprep.subr.bf16.mxu0 0
  %335 = vmatpush1.bf16.msra.mxu0 0
  %336 = vmatprep.subr.bf16.mxu0 0
  %337 = vmatpush1.bf16.msra.mxu0 0
  %338 = vmatprep.mubr.bf16.mxu0 0
  %339 = vmatmul.mubr.bf16.gmra.mrb[0].mxu0 %v304
  %v340 = vpop.f32.mrb[0].mxu0
  %v341 = vadd.f32 %v277, %v340
  %v342 = vpop.f32.mrb[0].mxu0
  %v343 = vpop.f32.mrb[0].mxu0
  %v344 = vpop.f32.mrb[0].mxu0
  %345 = vdwg.mxu0
  %346 = vst [vmem:[%s9] sm:$0xff] %v341
  // Predicated region
  $region38: #{state_action_value_residual.1} parent=0 // pred_check
    _
  $region39: #{state_action_value_residual.1} parent=0 // pred_check_branch
    %348 = sbr.rel (0) target = $region41
  $region40: #{state_action_value_residual.1} parent=0 // pred_region
    _
  $region41: #{state_action_value_residual.1} parent=0 // pred_fallthru
    _
  // Predicated region
  $region42: #{state_action_value_residual.1} parent=0 // pred_check
    _
  $region43: #{state_action_value_residual.1} parent=0 // pred_check_branch
    %350 = sbr.rel (0) target = $region45
  $region44: #{state_action_value_residual.1} parent=0 // pred_region
    _
  $region45: #{state_action_value_residual.1} parent=0 // pred_fallthru
    _

</llo_original>
